<compile_context>
chip_gen: v7x
topology: tpu7x:2x2x1
jax: 0.10.0
libtpu: 0.0.40
codegen_flags: <defaults>
</compile_context>

<pallas_src>
import math
import functools

import jax
import jax.numpy as jnp
from jax.experimental import pallas as pl
from jax.experimental.pallas import tpu as pltpu


# --------------------------------------------------------------------------
# Pallas kernel: fused   out = x + broadcast_over_batch(pe_slice)
# --------------------------------------------------------------------------

def _pe_add_kernel(x_ref, pe_ref, o_ref, *, batch):
    # x_ref : (bt, batch * d_model)  activation tile (lane-dense slab)
    # pe_ref: (bt, d_model)          positional-encoding rows for this tile
    pe = pe_ref[...]                                        # (bt, D), float32
    # Broadcast over batch along the lane dim: [pe | pe | ... | pe]  -> (bt, batch*D).
    # This matches x reshaped as (T, B*D) (row-major), where column k = b*D + d.
    pe_wide = jnp.tile(pe, (1, batch))
    o_ref[...] = (x_ref[...].astype(jnp.float32) + pe_wide).astype(o_ref.dtype)


def _pick_seq_tile(T, W, itemsize, vmem_budget_bytes=8 * 1024 * 1024):
    """Largest multiple-of-8 sequence tile whose (x + out + pe) double-buffered
    footprint stays under a conservative VMEM budget."""
    if T <= 8:
        return T
    # per-row bytes: x tile + out tile (x dtype) + pe tile (f32), double-buffered
    per_row = 2 * (2 * W * itemsize + W * 4)
    bt = max(8, min(T, vmem_budget_bytes // max(per_row, 1)))
    bt = (bt // 8) * 8            # sublane-aligned
    return max(8, min(bt, 512))   # 512 rows is already deep in the HBM-roofline regime


def positional_encoding(x, pe):
    """x: (T, B, D) float, pe: (max_len, 1, D) float32 buffer  ->  x + pe[:T]."""
    T, B, D = x.shape
    W = B * D
    pe2 = pe.reshape(pe.shape[0], D)          # (max_len, D)
    x2 = x.reshape(T, W)                      # contiguous, lane-dense view

    bt = _pick_seq_tile(T, W, x.dtype.itemsize)
    grid = (pl.cdiv(T, bt),)

    out = pl.pallas_call(
        functools.partial(_pe_add_kernel, batch=B),
        out_shape=jax.ShapeDtypeStruct((T, W), x.dtype),
        grid=grid,
        in_specs=[
            pl.BlockSpec((bt, W), lambda i: (i, 0)),   # activation tile
            pl.BlockSpec((bt, D), lambda i: (i, 0)),   # only pe rows [i*bt, i*bt+bt) are DMA'd
        ],
        out_specs=pl.BlockSpec((bt, W), lambda i: (i, 0)),
        compiler_params=pltpu.CompilerParams(
            dimension_semantics=("parallel",),
        ),
    )(x2, pe2)
    return out.reshape(T, B, D)


# --------------------------------------------------------------------------
# Init-time buffer (mirrors PyTorch register_buffer in __init__, not forward)
# --------------------------------------------------------------------------

def make_positional_encoding_table(d_model, max_len=5000):
    position = jnp.arange(max_len, dtype=jnp.float32)[:, None]
    div_term = jnp.exp(
        jnp.arange(0, d_model, 2, dtype=jnp.float32) * (-math.log(10000.0) / d_model)
    )
    pe = jnp.zeros((max_len, d_model), dtype=jnp.float32)
    pe = pe.at[:, 0::2].set(jnp.sin(position * div_term))
    pe = pe.at[:, 1::2].set(jnp.cos(position * div_term))
    return pe[:, None, :]                     # (max_len, 1, d_model), like PyTorch


# --------------------------------------------------------------------------
# Main
# --------------------------------------------------------------------------

if __name__ == "__main__":
    D_MODEL = 32
    MAX_LEN = 5000
    SEQ = 8
    BATCH = 2

    key = jax.random.PRNGKey(0)
    x = jax.random.normal(key, (SEQ, BATCH, D_MODEL), dtype=jnp.float32)
    pe = make_positional_encoding_table(D_MODEL, MAX_LEN)

    fwd = jax.jit(positional_encoding)
    y = fwd(x, pe)
    jax.block_until_ready(y)

    # Reference: exactly the PyTorch forward semantics.
    ref = x + pe[:SEQ]

    assert y.shape == (SEQ, BATCH, D_MODEL)
    assert bool(jnp.all(jnp.isfinite(y)))
    assert bool(jnp.allclose(y, ref, atol=1e-6, rtol=1e-6))
    print("KERNEL_OK")
</pallas_src>

<mosaic_0001>
module attributes {stable_mosaic.version = 11 : i64} {
  func.func @_pe_add_kernel(%arg0: i32, %arg1: memref<8x64xf32, #tpu.memory_space<vmem>>, %arg2: memref<8x32xf32, #tpu.memory_space<vmem>>, %arg3: memref<8x64xf32, #tpu.memory_space<vmem>>) attributes {dimension_semantics = [#tpu.dimension_semantics<parallel>], iteration_bounds = array<i64: 1>, scalar_prefetch = 0 : i64, scratch_operands = 0 : i64, tpu.core_type = #tpu.core_type<tc>, window_params = [{transform_indices = @transform_0, window_bounds = array<i64: 8, 64>}, {transform_indices = @transform_1, window_bounds = array<i64: 8, 32>}, {transform_indices = @transform_2, window_bounds = array<i64: 8, 64>}]} {
    %c0 = arith.constant 0 : index
    %c0_0 = arith.constant 0 : index
    %0 = vector.load %arg2[%c0, %c0_0] : memref<8x32xf32, #tpu.memory_space<vmem>>, vector<8x32xf32>
    %1 = tpu.concatenate %0, %0 in 1 : vector<8x32xf32>, vector<8x32xf32> -> vector<8x64xf32>
    %c0_1 = arith.constant 0 : index
    %c0_2 = arith.constant 0 : index
    %2 = vector.load %arg1[%c0_1, %c0_2] : memref<8x64xf32, #tpu.memory_space<vmem>>, vector<8x64xf32>
    %3 = arith.addf %2, %1 : vector<8x64xf32>
    %c0_3 = arith.constant 0 : index
    %c0_4 = arith.constant 0 : index
    %4 = vector.load %arg3[%c0_3, %c0_4] : memref<8x64xf32, #tpu.memory_space<vmem>>, vector<8x64xf32>
    tpu.vector_store %arg3[%c0_3, %c0_4], %3 {strides = array<i32>} : memref<8x64xf32, #tpu.memory_space<vmem>>, vector<8x64xf32>,
    return
  }
  func.func @transform_0(%arg0: i32) -> (i32, i32) {
    %c0_i32 = arith.constant 0 : i32
    %c0_i32_0 = arith.constant 0 : i32
    return %arg0, %c0_i32 : i32, i32
  }
  func.func @transform_1(%arg0: i32) -> (i32, i32) {
    %c0_i32 = arith.constant 0 : i32
    %c0_i32_0 = arith.constant 0 : i32
    return %arg0, %c0_i32 : i32, i32
  }
  func.func @transform_2(%arg0: i32) -> (i32, i32) {
    %c0_i32 = arith.constant 0 : i32
    %c0_i32_0 = arith.constant 0 : i32
    return %arg0, %c0_i32 : i32, i32
  }
}

</mosaic_0001>

<llo_original>
// kernel: positional_encoding.1
$region0: #{positional_encoding.1}
  #allocation0 [shape = 'u32[]', space=smem, size = 0x4, offset = 0x4, fixed_abs, tag = 'smem constant byte address 0x4 - core index']
  #allocation1 [shape = 'u32[144,128]{1,0:T(1,128)}', space=vmem, size = 0x12000, scoped, tag = 'internal scratch']
  %s0 = inlined_call_operand.vmem [shape: f32[8,64], index: 0, kind: input, shape index: {}]
  %s1 = inlined_call_operand.vmem [shape: f32[5000,32], index: 1, kind: input, shape index: {}]
  %s2 = inlined_call_operand.vmem [shape: f32[8,64], index: 2, kind: output, shape index: {}]
  %s3 = sld [smem:[#allocation0]]
  $region18: #{positional_encoding.1} parent=0
    _
  %s5 = ssub.s32 1, %s3
  %s6 = scalar_select 0, %s5, %s3
  // Predicated region
  $region2: #{positional_encoding.1} parent=0 // pred_check
    _
  $region3: #{positional_encoding.1} parent=0 // pred_check_branch
    %8 = sbr.rel (0) target = $region5
  $region4: #{positional_encoding.1} parent=0 // pred_region
    _
  $region5: #{positional_encoding.1} parent=0 // pred_fallthru
    _
  // Predicated region
  $region6: #{positional_encoding.1} parent=0 // pred_check
    _
  $region7: #{positional_encoding.1} parent=0 // pred_check_branch
    %10 = sbr.rel (0) target = $region9
  $region8: #{positional_encoding.1} parent=0 // pred_region
    _
  $region9: #{positional_encoding.1} parent=0 // pred_fallthru
    _
  %v11 = vld [vmem:[%s1] sm:$0xff]
  %13 = vrot.lane.b32.xlu0 %v11, 32
  %v14 = vpop.permute.xlu0 %13
  %vm16 = vcmask 261120
  %v17 = vsel %vm16, %v11, %v14
  %v18 = vld [vmem:[%s0] sm:$0xff]
  %v19 = vadd.f32 %v18, %v17
  %vm20 = vcmask 523264
  %21 = vst.msk [vmem:[%s2] sm:$0xff] %vm20, %v19
  // Predicated region
  $region10: #{positional_encoding.1} parent=0 // pred_check
    _
  $region11: #{positional_encoding.1} parent=0 // pred_check_branch
    %23 = sbr.rel (0) target = $region13
  $region12: #{positional_encoding.1} parent=0 // pred_region
    _
  $region13: #{positional_encoding.1} parent=0 // pred_fallthru
    _
  // Predicated region
  $region14: #{positional_encoding.1} parent=0 // pred_check
    _
  $region15: #{positional_encoding.1} parent=0 // pred_check_branch
    %25 = sbr.rel (0) target = $region17
  $region16: #{positional_encoding.1} parent=0 // pred_region
    _
  $region17: #{positional_encoding.1} parent=0 // pred_fallthru
    _

</llo_original>
